<compile_context>
chip_gen: v7x
topology: tpu7x:2x2x1
jax: 0.10.0
libtpu: 0.0.40
codegen_flags: <defaults>
</compile_context>

<pallas_src>
import jax
import jax.numpy as jnp
from jax.experimental import pallas as pl
from jax.experimental.pallas import tpu as pltpu


def _cheb_conv_kernel(x_ref, chebT_ref, thetaBD_ref, o_ref):
    """One batch element, all timesteps at once.

    x_ref:       (1, N, F_in*T)        graph signal, time folded into lanes
    chebT_ref:   (K, N, N)             pre-transposed Chebyshev polys (T_k^T)
    thetaBD_ref: (K, F_in*T, F_out*T)  time-block-diagonal Theta_k
    o_ref:       (1, N, F_out*T)       relu(sum_k (T_k^T @ X) @ ThetaBD_k)
    """
    K = chebT_ref.shape[0]
    N = chebT_ref.shape[1]
    fout_t = thetaBD_ref.shape[2]
    cdt = chebT_ref.dtype                      # MXU operand dtype (bf16 or f32)

    gs = x_ref[0].astype(cdt)                  # (N, F_in*T) -- read & cast once
    acc = jnp.zeros((N, fout_t), dtype=jnp.float32)
    for k in range(K):                         # K small & static -> unrolled
        # Graph matmul: contraction over N nodes, lanes = F_in*T (all timesteps).
        rk = jnp.dot(chebT_ref[k], gs, preferred_element_type=jnp.float32)
        # Fused Theta matmul: contraction depth F_in*T, lane-dense (N, F_out*T).
        acc = acc + jnp.dot(rk.astype(cdt), thetaBD_ref[k],
                            preferred_element_type=jnp.float32)
    o_ref[0] = jnp.maximum(acc, 0.0).astype(o_ref.dtype)


def cheb_conv_pallas(x, cheb_polynomials, theta, *, compute_dtype=jnp.bfloat16):
    """
    x:                 (B, N, F_in, T)  float32
    cheb_polynomials:  (K, N, N)        float32  (T_k, NOT transposed)
    theta:             (K, F_in, F_out) float32
    returns:           (B, N, F_out, T) float32
    """
    B, N, F_in, T = x.shape
    K = cheb_polynomials.shape[0]
    F_out = theta.shape[2]

    # (B, N, F_in, T) -> (B, N, F_in*T): pure reshape, column index = f*T + t.
    # No transpose => no extra HBM read+write pass in the wrapper.
    x2 = x.reshape(B, N, F_in * T)

    # Grid-invariant operands (tiny): pre-transpose T_k and build the
    # time-block-diagonal Theta, cast once to the MXU compute dtype.
    chebT = jnp.transpose(cheb_polynomials, (0, 2, 1)).astype(compute_dtype)   # (K,N,N)
    eye_t = jnp.eye(T, dtype=theta.dtype)
    theta_bd = jnp.einsum("kfo,ts->kftos", theta, eye_t)                       # (K,F_in,T,F_out,T)
    theta_bd = theta_bd.reshape(K, F_in * T, F_out * T).astype(compute_dtype)

    itemsize_c = jnp.dtype(compute_dtype).itemsize
    itemsize_x = jnp.dtype(x.dtype).itemsize
    flops = 2 * B * K * N * (F_in * T) * (N + F_out * T)
    bytes_accessed = (x2.size * itemsize_x
                      + chebT.size * itemsize_c
                      + theta_bd.size * itemsize_c
                      + B * N * F_out * T * itemsize_x)

    out2 = pl.pallas_call(
        _cheb_conv_kernel,
        out_shape=jax.ShapeDtypeStruct((B, N, F_out * T), x.dtype),
        grid_spec=pltpu.PrefetchScalarGridSpec(
            num_scalar_prefetch=0,
            grid=(B,),
            in_specs=[
                pl.BlockSpec((1, N, F_in * T), lambda b: (b, 0, 0)),
                # Grid-invariant: constant index_map => fetched once, reused every step.
                pl.BlockSpec((K, N, N), lambda b: (0, 0, 0)),
                pl.BlockSpec((K, F_in * T, F_out * T), lambda b: (0, 0, 0)),
            ],
            out_specs=pl.BlockSpec((1, N, F_out * T), lambda b: (b, 0, 0)),
        ),
        compiler_params=pltpu.CompilerParams(
            # Batch axis is fully independent -> megacore / v7x 2-TC sharding.
            dimension_semantics=("parallel",),
            # Demo shapes are tiny; large-N configs should raise this and tile N.
            vmem_limit_bytes=32 * 1024 * 1024,
        ),
        cost_estimate=pl.CostEstimate(
            flops=flops, transcendentals=0, bytes_accessed=bytes_accessed),
    )(x2, chebT, theta_bd)

    # (B, N, F_out*T) -> (B, N, F_out, T): pure reshape (column index = o*T + t).
    return out2.reshape(B, N, F_out, T)


def cheb_conv_reference(x, cheb_polynomials, theta):
    """Pure-JAX reference mirroring the PyTorch forward."""
    B, N, F_in, T = x.shape
    K = cheb_polynomials.shape[0]
    F_out = theta.shape[2]
    outs = []
    for t in range(T):
        gs = x[:, :, :, t]                               # (B, N, F_in)
        out = jnp.zeros((B, N, F_out), dtype=jnp.float32)
        for k in range(K):
            T_k = cheb_polynomials[k]                    # (N, N)
            theta_k = theta[k]                           # (F_in, F_out)
            rhs = jnp.einsum("bmf,mn->bnf", gs, T_k)     # permute/matmul/permute
            out = out + rhs @ theta_k
        outs.append(out[..., None])
    return jax.nn.relu(jnp.concatenate(outs, axis=-1))


if __name__ == "__main__":
    # Small, forward-consistent shapes.
    B, N, F_in, F_out, T, K = 2, 16, 4, 8, 8, 3

    key = jax.random.PRNGKey(0)
    k_x, k_L, k_theta = jax.random.split(key, 3)

    x = jax.random.normal(k_x, (B, N, F_in, T), dtype=jnp.float32)

    # Deterministic synthetic Chebyshev polynomials: T_0 = I, T_1 = L~,
    # T_k = 2 L~ T_{k-1} - T_{k-2}, for a symmetric "scaled Laplacian".
    A = jax.random.normal(k_L, (N, N), dtype=jnp.float32)
    L_tilde = 0.1 * (A + A.T) / 2.0
    polys = [jnp.eye(N, dtype=jnp.float32), L_tilde]
    for _ in range(2, K):
        polys.append(2.0 * L_tilde @ polys[-1] - polys[-2])
    cheb_polynomials = jnp.stack(polys[:K], axis=0)      # (K, N, N)

    # Deterministic Theta init (PyTorch leaves them uninitialized).
    theta = 0.1 * jax.random.normal(k_theta, (K, F_in, F_out), dtype=jnp.float32)

    ref = cheb_conv_reference(x, cheb_polynomials, theta)

    # Exact-precision path (f32 MXU operands) -- tight tolerance.
    out_f32 = cheb_conv_pallas(x, cheb_polynomials, theta, compute_dtype=jnp.float32)
    out_f32 = jax.block_until_ready(out_f32)
    assert out_f32.shape == (B, N, F_out, T), out_f32.shape
    assert jnp.allclose(out_f32, ref, atol=1e-4, rtol=1e-4), "f32 path mismatch vs reference"

    # Default fast path (bf16 MXU operands, f32 accumulation) -- relaxed tolerance.
    out_bf16 = cheb_conv_pallas(x, cheb_polynomials, theta)
    out_bf16 = jax.block_until_ready(out_bf16)
    assert out_bf16.shape == (B, N, F_out, T), out_bf16.shape
    assert jnp.allclose(out_bf16, ref, atol=3e-2, rtol=3e-2), "bf16 path mismatch vs reference"

    print("KERNEL_OK")
</pallas_src>

<mosaic_0001>
module attributes {stable_mosaic.version = 11 : i64} {
  func.func @_cheb_conv_kernel(%arg0: i32, %arg1: memref<1x16x32xf32, #tpu.memory_space<vmem>>, %arg2: memref<3x16x16xf32, #tpu.memory_space<vmem>>, %arg3: memref<3x32x64xf32, #tpu.memory_space<vmem>>, %arg4: memref<1x16x64xf32, #tpu.memory_space<vmem>>) attributes {dimension_semantics = [#tpu.dimension_semantics<parallel>], iteration_bounds = array<i64: 2>, scalar_prefetch = 0 : i64, scratch_operands = 0 : i64, tpu.core_type = #tpu.core_type<tc>, window_params = [{transform_indices = @transform_0, window_bounds = array<i64: 1, 16, 32>}, {pipeline_mode = #tpu.pipeline_mode<synchronous>, transform_indices = @transform_1, window_bounds = array<i64: 3, 16, 16>}, {pipeline_mode = #tpu.pipeline_mode<synchronous>, transform_indices = @transform_2, window_bounds = array<i64: 3, 32, 64>}, {transform_indices = @transform_3, window_bounds = array<i64: 1, 16, 64>}]} {
    %c0 = arith.constant 0 : index
    %c0_0 = arith.constant 0 : index
    %c0_1 = arith.constant 0 : index
    %0 = vector.load %arg1[%c0, %c0_0, %c0_1] : memref<1x16x32xf32, #tpu.memory_space<vmem>>, vector<1x16x32xf32>
    %1 = vector.shape_cast %0 : vector<1x16x32xf32> to vector<16x32xf32>
    %cst = arith.constant 0.000000e+00 : f32
    %2 = vector.broadcast %cst : f32 to vector<16x64xf32>
    %c0_2 = arith.constant 0 : index
    %c0_3 = arith.constant 0 : index
    %c0_4 = arith.constant 0 : index
    %3 = vector.load %arg2[%c0_2, %c0_3, %c0_4] : memref<3x16x16xf32, #tpu.memory_space<vmem>>, vector<1x16x16xf32>
    %4 = vector.shape_cast %3 : vector<1x16x16xf32> to vector<16x16xf32>
    %cst_5 = arith.constant dense<0.000000e+00> : vector<16x32xf32>
    %5 = tpu.matmul %4, %1, %cst_5 {dimension_numbers = #tpu.dot_dimension_numbers<[1], [0], [0], [1], [0, 0, 1, 1], [], []>} : vector<16x16xf32>, vector<16x32xf32>, vector<16x32xf32> -> vector<16x32xf32>
    %c0_6 = arith.constant 0 : index
    %c0_7 = arith.constant 0 : index
    %c0_8 = arith.constant 0 : index
    %6 = vector.load %arg3[%c0_6, %c0_7, %c0_8] : memref<3x32x64xf32, #tpu.memory_space<vmem>>, vector<1x32x64xf32>
    %7 = vector.shape_cast %6 : vector<1x32x64xf32> to vector<32x64xf32>
    %cst_9 = arith.constant dense<0.000000e+00> : vector<16x64xf32>
    %8 = tpu.matmul %5, %7, %cst_9 {dimension_numbers = #tpu.dot_dimension_numbers<[1], [0], [0], [1], [0, 0, 1, 1], [], []>} : vector<16x32xf32>, vector<32x64xf32>, vector<16x64xf32> -> vector<16x64xf32>
    %9 = arith.addf %2, %8 : vector<16x64xf32>
    %c1 = arith.constant 1 : index
    %c0_10 = arith.constant 0 : index
    %c0_11 = arith.constant 0 : index
    %10 = vector.load %arg2[%c1, %c0_10, %c0_11] : memref<3x16x16xf32, #tpu.memory_space<vmem>>, vector<1x16x16xf32>
    %11 = vector.shape_cast %10 : vector<1x16x16xf32> to vector<16x16xf32>
    %cst_12 = arith.constant dense<0.000000e+00> : vector<16x32xf32>
    %12 = tpu.matmul %11, %1, %cst_12 {dimension_numbers = #tpu.dot_dimension_numbers<[1], [0], [0], [1], [0, 0, 1, 1], [], []>} : vector<16x16xf32>, vector<16x32xf32>, vector<16x32xf32> -> vector<16x32xf32>
    %c1_13 = arith.constant 1 : index
    %c0_14 = arith.constant 0 : index
    %c0_15 = arith.constant 0 : index
    %13 = vector.load %arg3[%c1_13, %c0_14, %c0_15] : memref<3x32x64xf32, #tpu.memory_space<vmem>>, vector<1x32x64xf32>
    %14 = vector.shape_cast %13 : vector<1x32x64xf32> to vector<32x64xf32>
    %cst_16 = arith.constant dense<0.000000e+00> : vector<16x64xf32>
    %15 = tpu.matmul %12, %14, %cst_16 {dimension_numbers = #tpu.dot_dimension_numbers<[1], [0], [0], [1], [0, 0, 1, 1], [], []>} : vector<16x32xf32>, vector<32x64xf32>, vector<16x64xf32> -> vector<16x64xf32>
    %16 = arith.addf %9, %15 : vector<16x64xf32>
    %c2 = arith.constant 2 : index
    %c0_17 = arith.constant 0 : index
    %c0_18 = arith.constant 0 : index
    %17 = vector.load %arg2[%c2, %c0_17, %c0_18] : memref<3x16x16xf32, #tpu.memory_space<vmem>>, vector<1x16x16xf32>
    %18 = vector.shape_cast %17 : vector<1x16x16xf32> to vector<16x16xf32>
    %cst_19 = arith.constant dense<0.000000e+00> : vector<16x32xf32>
    %19 = tpu.matmul %18, %1, %cst_19 {dimension_numbers = #tpu.dot_dimension_numbers<[1], [0], [0], [1], [0, 0, 1, 1], [], []>} : vector<16x16xf32>, vector<16x32xf32>, vector<16x32xf32> -> vector<16x32xf32>
    %c2_20 = arith.constant 2 : index
    %c0_21 = arith.constant 0 : index
    %c0_22 = arith.constant 0 : index
    %20 = vector.load %arg3[%c2_20, %c0_21, %c0_22] : memref<3x32x64xf32, #tpu.memory_space<vmem>>, vector<1x32x64xf32>
    %21 = vector.shape_cast %20 : vector<1x32x64xf32> to vector<32x64xf32>
    %cst_23 = arith.constant dense<0.000000e+00> : vector<16x64xf32>
    %22 = tpu.matmul %19, %21, %cst_23 {dimension_numbers = #tpu.dot_dimension_numbers<[1], [0], [0], [1], [0, 0, 1, 1], [], []>} : vector<16x32xf32>, vector<32x64xf32>, vector<16x64xf32> -> vector<16x64xf32>
    %23 = arith.addf %16, %22 : vector<16x64xf32>
    %cst_24 = arith.constant 0.000000e+00 : f32
    %24 = vector.broadcast %cst_24 : f32 to vector<16x64xf32>
    %25 = arith.maximumf %23, %24 : vector<16x64xf32>
    %c0_25 = arith.constant 0 : index
    %c0_26 = arith.constant 0 : index
    %c0_27 = arith.constant 0 : index
    %26 = vector.load %arg4[%c0_25, %c0_26, %c0_27] : memref<1x16x64xf32, #tpu.memory_space<vmem>>, vector<1x16x64xf32>
    %27 = vector.shape_cast %26 : vector<1x16x64xf32> to vector<16x64xf32>
    %28 = vector.shape_cast %25 : vector<16x64xf32> to vector<1x16x64xf32>
    tpu.vector_store %arg4[%c0_25, %c0_26, %c0_27], %28 {strides = array<i32>} : memref<1x16x64xf32, #tpu.memory_space<vmem>>, vector<1x16x64xf32>,
    return
  }
  func.func @transform_0(%arg0: i32) -> (i32, i32, i32) {
    %c0_i32 = arith.constant 0 : i32
    %c0_i32_0 = arith.constant 0 : i32
    %c0_i32_1 = arith.constant 0 : i32
    return %arg0, %c0_i32, %c0_i32_0 : i32, i32, i32
  }
  func.func @transform_1(%arg0: i32) -> (i32, i32, i32) {
    %c0_i32 = arith.constant 0 : i32
    %c0_i32_0 = arith.constant 0 : i32
    %c0_i32_1 = arith.constant 0 : i32
    %c0_i32_2 = arith.constant 0 : i32
    return %c0_i32, %c0_i32_0, %c0_i32_1 : i32, i32, i32
  }
  func.func @transform_2(%arg0: i32) -> (i32, i32, i32) {
    %c0_i32 = arith.constant 0 : i32
    %c0_i32_0 = arith.constant 0 : i32
    %c0_i32_1 = arith.constant 0 : i32
    %c0_i32_2 = arith.constant 0 : i32
    return %c0_i32, %c0_i32_0, %c0_i32_1 : i32, i32, i32
  }
  func.func @transform_3(%arg0: i32) -> (i32, i32, i32) {
    %c0_i32 = arith.constant 0 : i32
    %c0_i32_0 = arith.constant 0 : i32
    %c0_i32_1 = arith.constant 0 : i32
    return %arg0, %c0_i32, %c0_i32_0 : i32, i32, i32
  }
}

</mosaic_0001>

<llo_original>
// kernel: tpu_custom_call.1
$region0: #{tpu_custom_call.1}
  #allocation0 [shape = 'u32[]', space=smem, size = 0x4, offset = 0x4, fixed_abs, tag = 'smem constant byte address 0x4 - core index']
  #allocation1 [shape = 'u32[144,128]{1,0:T(1,128)}', space=vmem, size = 0x12000, scoped, tag = 'internal scratch']
  %s0 = inlined_call_operand.hbm [shape: f32[2,16,32], index: 0, kind: input, shape index: {}]
  %s1 = inlined_call_operand.hbm [shape: f32[3,16,16], index: 1, kind: input, shape index: {}]
  %s2 = inlined_call_operand.hbm [shape: f32[3,32,64], index: 2, kind: input, shape index: {}]
  %s3 = inlined_call_operand.hbm [shape: f32[2,16,64], index: 3, kind: output, shape index: {}]
  %s4 = sld [smem:[#allocation0]]
  $region57: #{tpu_custom_call.1} parent=0
    _
  %s6 = ssub.s32 1, %s4
  %s7 = scalar_select 0, %s6, %s4
  $region1: #{tpu_custom_call.1} parent=0
    #allocation2 [shape = 'u8[16384]{0}', space=vmem, size = 0x4000, scoped, tag = 'input window, operand 0']
    #allocation3 [shape = 's32[2]{0}', space=sflag, size = 0x8, scoped, tag = 'scoped memory for tpu_custom_call.1']
    #allocation4 [shape = 's32[2]{0}', space=sflag, size = 0x8, scoped, tag = 'scoped memory for tpu_custom_call.1']
    #allocation5 [shape = 'u8[24576]{0}', space=vmem, size = 0x6000, scoped, tag = 'input window, operand 1, single buffered']
    #allocation6 [shape = 's32[1]{0}', space=sflag, size = 0x4, scoped, tag = 'scoped memory for tpu_custom_call.1']
    #allocation7 [shape = 'u8[49152]{0}', space=vmem, size = 0xc000, scoped, tag = 'input window, operand 2, single buffered']
    #allocation8 [shape = 'u8[16384]{0}', space=vmem, size = 0x4000, scoped, tag = 'output window, operand 0']
    %8 = vsyncpa [#allocation3], 0
    %s9 = scalar_lea.sflag [#allocation3], 1
    %10 = vsyncpa %s9, 0
    %11 = vsyncpa [#allocation6], 0
    %12 = vsyncpa [#allocation4], 0
    %s13 = scalar_lea.sflag [#allocation4], 1
    %14 = vsyncpa %s13, 0
    loop: start=0, step=1, limit=4
    $region2: #{tpu_custom_call.1} parent=1 // loop_pre_header
      _
    $region3: #{tpu_custom_call.1} parent=1 // loop_header
      %s16 = sphi 0, %s20
      %p17 = scmp.ge.s32.totalorder %s16, 4
      %s26 = sphi 0, %s28
      %s29 = sphi 0, %s26
      %s30 = sphi 0, %s29
      %s46 = sphi 0, %s30
      %s50 = sphi 0, %s50
      %s52 = sphi 0, %s50
      %s53 = sphi 0, %s52
      %s67 = sphi 0, %s53
      %s71 = sphi 0, %s71
      %s73 = sphi 0, %s71
      %s74 = sphi 0, %s73
      %s88 = sphi 0, %s74
      %s94 = sphi 0, %s96
      %s97 = sphi 0, %s94
      %s98 = sphi 0, %s97
      %s114 = sphi 0, %s98
    $region4: #{tpu_custom_call.1} parent=1 // loop_header_branch
      %19 = sbr.rel (%p17) target = $region8
    $region5: #{tpu_custom_call.1} parent=1 // loop_body
      %s21 = ssub.s32 %s16, 1
      %s22 = ssub.s32 %s16, 2
      %s23 = sadd.s32 %s16, 1
      %s24 = ssub.s32 %s16, %s23
      %p25 = scmp.eq.s32.totalorder %s24, 0
      %s27 = sadd.s32 %s26, 1
      %s28 = scalar_select %p25, %s26, %s27
      %p31 = pneg %p25
      %p32 = scmp.eq.s32.totalorder %s16, 1
      %p33 = por %p31, %p32
      %p34 = scmp.ne.s32.totalorder %s26, %s29
      %p35 = scmp.eq.s32.totalorder %s16, 0
      %p36 = por %p34, %p35
      %p37 = scmp.ne.s32.totalorder %s26, %s29
      %p38 = scmp.eq.s32.totalorder %s21, 1
      %p39 = por %p37, %p38
      %p40 = scmp.ne.s32.totalorder %s29, %s30
      %p41 = scmp.eq.s32.totalorder %s21, 0
      %p42 = por %p40, %p41
      %p43 = scmp.ne.s32.totalorder %s29, %s30
      %p44 = scmp.eq.s32.totalorder %s22, 1
      %p45 = por %p43, %p44
      %p47 = scmp.ne.s32.totalorder %s30, %s46
      %p48 = scmp.eq.s32.totalorder %s22, 0
      %p49 = por %p47, %p48
      %s51 = sadd.s32 %s50, 1
      %p54 = scmp.eq.s32.totalorder %s16, 1
      %p55 = scmp.ne.s32.totalorder %s50, %s52
      %p56 = scmp.eq.s32.totalorder %s16, 0
      %p57 = por %p55, %p56
      %p58 = scmp.ne.s32.totalorder %s50, %s52
      %p59 = scmp.eq.s32.totalorder %s21, 1
      %p60 = por %p58, %p59
      %p61 = scmp.ne.s32.totalorder %s52, %s53
      %p62 = scmp.eq.s32.totalorder %s21, 0
      %p63 = por %p61, %p62
      %p64 = scmp.ne.s32.totalorder %s52, %s53
      %p65 = scmp.eq.s32.totalorder %s22, 1
      %p66 = por %p64, %p65
      %p68 = scmp.ne.s32.totalorder %s53, %s67
      %p69 = scmp.eq.s32.totalorder %s22, 0
      %p70 = por %p68, %p69
      %s72 = sadd.s32 %s71, 1
      %p75 = scmp.eq.s32.totalorder %s16, 1
      %p76 = scmp.ne.s32.totalorder %s71, %s73
      %p77 = scmp.eq.s32.totalorder %s16, 0
      %p78 = por %p76, %p77
      %p79 = scmp.ne.s32.totalorder %s71, %s73
      %p80 = scmp.eq.s32.totalorder %s21, 1
      %p81 = por %p79, %p80
      %p82 = scmp.ne.s32.totalorder %s73, %s74
      %p83 = scmp.eq.s32.totalorder %s21, 0
      %p84 = por %p82, %p83
      %p85 = scmp.ne.s32.totalorder %s73, %s74
      %p86 = scmp.eq.s32.totalorder %s22, 1
      %p87 = por %p85, %p86
      %p89 = scmp.ne.s32.totalorder %s74, %s88
      %p90 = scmp.eq.s32.totalorder %s22, 0
      %p91 = por %p89, %p90
      %s92 = ssub.s32 %s16, %s23
      %p93 = scmp.eq.s32.totalorder %s92, 0
      %s95 = sadd.s32 %s94, 1
      %s96 = scalar_select %p93, %s94, %s95
      %p99 = pneg %p93
      %p100 = scmp.eq.s32.totalorder %s16, 1
      %p101 = por %p99, %p100
      %p102 = scmp.ne.s32.totalorder %s94, %s97
      %p103 = scmp.eq.s32.totalorder %s16, 0
      %p104 = por %p102, %p103
      %p105 = scmp.ne.s32.totalorder %s94, %s97
      %p106 = scmp.eq.s32.totalorder %s21, 1
      %p107 = por %p105, %p106
      %p108 = scmp.ne.s32.totalorder %s97, %s98
      %p109 = scmp.eq.s32.totalorder %s21, 0
      %p110 = por %p108, %p109
      %p111 = scmp.ne.s32.totalorder %s97, %s98
      %p112 = scmp.eq.s32.totalorder %s22, 1
      %p113 = por %p111, %p112
      %p115 = scmp.ne.s32.totalorder %s98, %s114
      %p116 = scmp.eq.s32.totalorder %s22, 0
      %p117 = por %p115, %p116
      %p118 = scmp.le.s32.totalorder 1, %s16
      %p119 = scmp.lt.s32.totalorder %s16, 3
      %p120 = pnand %p118, %p119
      %p121 = pneg %p120
      // Predicated region
      $region9: #{tpu_custom_call.1} parent=5 // pred_check
        _
      $region10: #{tpu_custom_call.1} parent=5 // pred_check_branch
        %123 = sbr.rel (%p120) target = $region12
      $region11: #{tpu_custom_call.1} parent=5 // pred_region
        %s124 = ssub.s32 %s16, 1
        // Predicated region
        $region13: #{tpu_custom_call.1} parent=11 // pred_check
          %p125 = pneg %p63
        $region14: #{tpu_custom_call.1} parent=11 // pred_check_branch
          %127 = sbr.rel (%p125) target = $region16
        $region15: #{tpu_custom_call.1} parent=11 // pred_region
          %s129 = ssub.s32 768, 768
          %130 = vsyncadd [#allocation6], %s129
          %s131 = sshll.u32 [#allocation5], 4
          %s132 = int_to_ptr.vmem [resolvable:$true] %s131
          %137 = dma.hbm_to_vmem [thread:$0]  %s1, 768, %s132, [#allocation6], 128, 128, 8
        $region16: #{tpu_custom_call.1} parent=11 // pred_fallthru
          _
        // Predicated region
        $region17: #{tpu_custom_call.1} parent=11 // pred_check
          %p138 = pneg %p84
        $region18: #{tpu_custom_call.1} parent=11 // pred_check_branch
          %140 = sbr.rel (%p138) target = $region20
        $region19: #{tpu_custom_call.1} parent=11 // pred_region
          %s142 = ssub.s32 1536, 1536
          %143 = vsyncadd [#allocation6], %s142
          %s144 = sshll.u32 [#allocation7], 4
          %s145 = int_to_ptr.vmem [resolvable:$true] %s144
          %150 = dma.hbm_to_vmem [thread:$0]  %s2, 1536, %s145, [#allocation6], 128, 128, 8
        $region20: #{tpu_custom_call.1} parent=11 // pred_fallthru
          _
      $region12: #{tpu_custom_call.1} parent=5 // pred_fallthru
        _
      %p151 = scmp.lt.s32.totalorder %s16, 2
      // Predicated region
      $region21: #{tpu_custom_call.1} parent=5 // pred_check
        %p152 = pneg %p151
      $region22: #{tpu_custom_call.1} parent=5 // pred_check_branch
        %154 = sbr.rel (%p152) target = $region24
      $region23: #{tpu_custom_call.1} parent=5 // pred_region
        // Predicated region
        $region25: #{tpu_custom_call.1} parent=23 // pred_check
          %p155 = pneg %p36
        $region26: #{tpu_custom_call.1} parent=23 // pred_check_branch
          %157 = sbr.rel (%p155) target = $region28
        $region27: #{tpu_custom_call.1} parent=23 // pred_region
          %s158 = sand.u32 %s26, 1
          %s159 = scalar_lea.sflag [#allocation3], %s158
          %s160 = sand.u32 %s26, 1
          %s161 = smul.addr %s160, 16
          %s162 = scalar_lea.vmem [#allocation2], %s161
          %s164 = ssub.s32 256, 256
          %165 = vsyncadd %s159, %s164
          %s166 = smul.addr %s16, 2
          %s167 = smul.addr %s166, 128
          %s168 = scalar_lea.hbm %s0, %s167
          %s169 = sshll.u32 %s162, 4
          %s170 = int_to_ptr.vmem [resolvable:$true] %s169
          %175 = dma.hbm_to_vmem [thread:$0]  %s168, 256, %s170, %s159, 128, 128, 8
        $region28: #{tpu_custom_call.1} parent=23 // pred_fallthru
          _
      $region24: #{tpu_custom_call.1} parent=5 // pred_fallthru
        _
      %p176 = scmp.le.s32.totalorder 1, %s16
      %p177 = scmp.lt.s32.totalorder %s16, 3
      %p178 = pnand %p176, %p177
      %p179 = pneg %p178
      // Predicated region
      $region29: #{tpu_custom_call.1} parent=5 // pred_check
        _
      $region30: #{tpu_custom_call.1} parent=5 // pred_check_branch
        %181 = sbr.rel (%p178) target = $region32
      $region31: #{tpu_custom_call.1} parent=5 // pred_region
        %s182 = ssub.s32 %s16, 1
        %s183 = sand.u32 %s29, 1
        %s184 = scalar_lea.sflag [#allocation3], %s183
        %s185 = sand.u32 %s29, 1
        %s186 = smul.addr %s185, 16
        %s187 = scalar_lea.vmem [#allocation2], %s186
        // Predicated region
        $region33: #{tpu_custom_call.1} parent=31 // pred_check
          %p188 = pneg %p42
        $region34: #{tpu_custom_call.1} parent=31 // pred_check_branch
          %190 = sbr.rel (%p188) target = $region36
        $region35: #{tpu_custom_call.1} parent=31 // pred_region
          %191 = dma.done %s184, 256
        $region36: #{tpu_custom_call.1} parent=31 // pred_fallthru
          _
        // Predicated region
        $region37: #{tpu_custom_call.1} parent=31 // pred_check
          %p192 = pneg %p63
        $region38: #{tpu_custom_call.1} parent=31 // pred_check_branch
          %194 = sbr.rel (%p192) target = $region40
        $region39: #{tpu_custom_call.1} parent=31 // pred_region
          %195 = dma.done [#allocation6], 768
        $region40: #{tpu_custom_call.1} parent=31 // pred_fallthru
          _
        // Predicated region
        $region41: #{tpu_custom_call.1} parent=31 // pred_check
          %p196 = pneg %p84
        $region42: #{tpu_custom_call.1} parent=31 // pred_check_branch
          %198 = sbr.rel (%p196) target = $region44
        $region43: #{tpu_custom_call.1} parent=31 // pred_region
          %199 = dma.done [#allocation6], 1536
        $region44: #{tpu_custom_call.1} parent=31 // pred_fallthru
          _
        %s200 = sand.u32 %s29, 1
        %s201 = scalar_lea.sflag [#allocation3], %s200
        %s202 = sand.u32 %s29, 1
        %s203 = smul.addr %s202, 16
        %s204 = scalar_lea.vmem [#allocation2], %s203
        %p205 = pneg %p42
        %p206 = pneg %p39
        %p207 = pneg %p63
        %p208 = pneg %p60
        %p209 = pneg %p84
        %p210 = pneg %p81
        %p211 = pneg %p110
        %p212 = pneg %p107
        %s213 = sand.u32 %s97, 1
        %s214 = scalar_lea.sflag [#allocation4], %s213
        %s215 = sand.u32 %s97, 1
        %s216 = smul.addr %s215, 16
        %s217 = scalar_lea.vmem [#allocation8], %s216
        %v218 = vld [vmem:[%s187] sm:$0xff]
        %v219 = vld [vmem:[%s187 + $0x8] sm:$0xff]
        %v220 = vld [vmem:[#allocation5] sm:$0xff]
        %v221 = vld [vmem:[#allocation5 + $0x8] sm:$0xff]
        %vm222 = vcmask 130048
        %v224 = vsel %vm222, %v220, 0
        %v227 = vsel %vm222, %v221, 0
        %229 = vmatprep.subr.mxu0 0.0
        %230 = vmatpush1.msra.mxu0 %v218
        %231 = vmatprep.subr.mxu0 0.0
        %232 = vmatpush1.msra.mxu0 %v219
        %233 = vmatprep.subr.mxu0 0.0
        %234 = vmatpush1.msra.mxu0 0.0
        %235 = vmatprep.subr.mxu0 0.0
        %236 = vmatpush1.msra.mxu0 0.0
        %237 = vmatprep.subr.mxu0 0.0
        %238 = vmatpush1.msra.mxu0 0.0
        %239 = vmatprep.subr.mxu0 0.0
        %240 = vmatpush1.msra.mxu0 0.0
        %241 = vmatprep.subr.mxu0 0.0
        %242 = vmatpush1.msra.mxu0 0.0
        %243 = vmatprep.subr.mxu0 0.0
        %244 = vmatpush1.msra.mxu0 0.0
        %245 = vmatprep.subr.mxu0 0.0
        %246 = vmatpush1.msra.mxu0 0.0
        %247 = vmatprep.subr.mxu0 0.0
        %248 = vmatpush1.msra.mxu0 0.0
        %249 = vmatprep.subr.mxu0 0.0
        %250 = vmatpush1.msra.mxu0 0.0
        %251 = vmatprep.subr.mxu0 0.0
        %252 = vmatpush1.msra.mxu0 0.0
        %253 = vmatprep.subr.mxu0 0.0
        %254 = vmatpush1.msra.mxu0 0.0
        %255 = vmatprep.subr.mxu0 0.0
        %256 = vmatpush1.msra.mxu0 0.0
        %257 = vmatprep.subr.mxu0 0.0
        %258 = vmatpush1.msra.mxu0 0.0
        %259 = vmatprep.subr.mxu0 0.0
        %260 = vmatpush1.msra.mxu0 0.0
        %261 = vmatprep.subr.mxu0 0.0
        %262 = vmatpush1.msra.mxu0 0.0
        %263 = vmatprep.subr.mxu0 0.0
        %264 = vmatpush1.msra.mxu0 0.0
        %265 = vmatprep.subr.mxu0 0.0
        %266 = vmatpush1.msra.mxu0 0.0
        %267 = vmatprep.subr.mxu0 0.0
        %268 = vmatpush1.msra.mxu0 0.0
        %269 = vmatprep.subr.mxu0 0.0
        %270 = vmatpush1.msra.mxu0 0.0
        %271 = vmatprep.subr.mxu0 0.0
        %272 = vmatpush1.msra.mxu0 0.0
        %273 = vmatprep.subr.mxu0 0.0
        %274 = vmatpush1.msra.mxu0 0.0
        %275 = vmatprep.subr.mxu0 0.0
        %276 = vmatpush1.msra.mxu0 0.0
        %277 = vmatprep.subr.mxu0 0.0
        %278 = vmatpush1.msra.mxu0 0.0
        %279 = vmatprep.subr.mxu0 0.0
        %280 = vmatpush1.msra.mxu0 0.0
        %281 = vmatprep.subr.mxu0 0.0
        %282 = vmatpush1.msra.mxu0 0.0
        %283 = vmatprep.subr.mxu0 0.0
        %284 = vmatpush1.msra.mxu0 0.0
        %285 = vmatprep.subr.mxu0 0.0
        %286 = vmatpush1.msra.mxu0 0.0
        %287 = vmatprep.subr.mxu0 0.0
        %288 = vmatpush1.msra.mxu0 0.0
        %289 = vmatprep.subr.mxu0 0.0
        %290 = vmatpush1.msra.mxu0 0.0
        %291 = vmatprep.subr.mxu0 0.0
        %292 = vmatpush1.msra.mxu0 0.0
        %293 = vmatprep.mubr.f32.mxu0 0.0
        %294 = vmatmul.mubr.f32.gmra.mrb[0].mxu0 %v224
        %v295 = vpop.f32.mrb[0].mxu0
        %v296 = vadd.f32 0.0, %v295
        %v297 = vpop.f32.mrb[0].mxu0
        %298 = vmatprep.mubr.f32.mxu0 0.0
        %299 = vmatmul.mubr.f32.gmra.mrb[0].mxu0 %v227
        %v300 = vpop.f32.mrb[0].mxu0
        %v301 = vadd.f32 0.0, %v300
        %v302 = vpop.f32.mrb[0].mxu0
        %303 = vdwg.mxu0
        %v304 = vld [vmem:[#allocation7] sm:$0xff]
        %v305 = vld [vmem:[#allocation7 + $0x8] sm:$0xff]
        %v306 = vld [vmem:[#allocation7 + $0x10] sm:$0xff]
        %v307 = vld [vmem:[#allocation7 + $0x18] sm:$0xff]
        %s308 = scalar_lea.vmem [#allocation5], 16
        %v309 = vld [vmem:[%s308] sm:$0xff]
        %v310 = vld [vmem:[%s308 + $0x8] sm:$0xff]
        %v312 = vsel %vm222, %v309, 0
        %v315 = vsel %vm222, %v310, 0
        %317 = vmatprep.subr.mxu0 0.0
        %318 = vmatpush1.msra.mxu0 %v218
        %319 = vmatprep.subr.mxu0 0.0
        %320 = vmatpush1.msra.mxu0 %v219
        %321 = vmatprep.subr.mxu0 0.0
        %322 = vmatpush1.msra.mxu0 0.0
        %323 = vmatprep.subr.mxu0 0.0
        %324 = vmatpush1.msra.mxu0 0.0
        %325 = vmatprep.subr.mxu0 0.0
        %326 = vmatpush1.msra.mxu0 0.0
        %327 = vmatprep.subr.mxu0 0.0
        %328 = vmatpush1.msra.mxu0 0.0
        %329 = vmatprep.subr.mxu0 0.0
        %330 = vmatpush1.msra.mxu0 0.0
        %331 = vmatprep.subr.mxu0 0.0
        %332 = vmatpush1.msra.mxu0 0.0
        %333 = vmatprep.subr.mxu0 0.0
        %334 = vmatpush1.msra.mxu0 0.0
        %335 = vmatprep.subr.mxu0 0.0
        %336 = vmatpush1.msra.mxu0 0.0
        %337 = vmatprep.subr.mxu0 0.0
        %338 = vmatpush1.msra.mxu0 0.0
        %339 = vmatprep.subr.mxu0 0.0
        %340 = vmatpush1.msra.mxu0 0.0
        %341 = vmatprep.subr.mxu0 0.0
        %342 = vmatpush1.msra.mxu0 0.0
        %343 = vmatprep.subr.mxu0 0.0
        %344 = vmatpush1.msra.mxu0 0.0
        %345 = vmatprep.subr.mxu0 0.0
        %346 = vmatpush1.msra.mxu0 0.0
        %347 = vmatprep.subr.mxu0 0.0
        %348 = vmatpush1.msra.mxu0 0.0
        %349 = vmatprep.subr.mxu0 0.0
        %350 = vmatpush1.msra.mxu0 0.0
        %351 = vmatprep.subr.mxu0 0.0
        %352 = vmatpush1.msra.mxu0 0.0
        %353 = vmatprep.subr.mxu0 0.0
        %354 = vmatpush1.msra.mxu0 0.0
        %355 = vmatprep.subr.mxu0 0.0
        %356 = vmatpush1.msra.mxu0 0.0
        %357 = vmatprep.subr.mxu0 0.0
        %358 = vmatpush1.msra.mxu0 0.0
        %359 = vmatprep.subr.mxu0 0.0
        %360 = vmatpush1.msra.mxu0 0.0
        %361 = vmatprep.subr.mxu0 0.0
        %362 = vmatpush1.msra.mxu0 0.0
        %363 = vmatprep.subr.mxu0 0.0
        %364 = vmatpush1.msra.mxu0 0.0
        %365 = vmatprep.subr.mxu0 0.0
        %366 = vmatpush1.msra.mxu0 0.0
        %367 = vmatprep.subr.mxu0 0.0
        %368 = vmatpush1.msra.mxu0 0.0
        %369 = vmatprep.subr.mxu0 0.0
        %370 = vmatpush1.msra.mxu0 0.0
        %371 = vmatprep.subr.mxu0 0.0
        %372 = vmatpush1.msra.mxu0 0.0
        %373 = vmatprep.subr.mxu0 0.0
        %374 = vmatpush1.msra.mxu0 0.0
        %375 = vmatprep.subr.mxu0 0.0
        %376 = vmatpush1.msra.mxu0 0.0
        %377 = vmatprep.subr.mxu0 0.0
        %378 = vmatpush1.msra.mxu0 0.0
        %379 = vmatprep.subr.mxu0 0.0
        %380 = vmatpush1.msra.mxu0 0.0
        %381 = vmatprep.mubr.f32.mxu0 0.0
        %382 = vmatmul.mubr.f32.gmra.mrb[0].mxu0 %v312
        %v383 = vpop.f32.mrb[0].mxu0
        %v384 = vadd.f32 0.0, %v383
        %v385 = vpop.f32.mrb[0].mxu0
        %386 = vmatprep.mubr.f32.mxu0 0.0
        %387 = vmatmul.mubr.f32.gmra.mrb[0].mxu0 %v315
        %v388 = vpop.f32.mrb[0].mxu0
        %v389 = vadd.f32 0.0, %v388
        %v390 = vpop.f32.mrb[0].mxu0
        %391 = vdwg.mxu0
        %s392 = scalar_lea.vmem [#allocation7], 32
        %v393 = vld [vmem:[%s392] sm:$0xff]
        %v394 = vld [vmem:[%s392 + $0x8] sm:$0xff]
        %v395 = vld [vmem:[%s392 + $0x10] sm:$0xff]
        %v396 = vld [vmem:[%s392 + $0x18] sm:$0xff]
        %vm397 = vcmask 261120
        %v399 = vsel %vm397, %v384, 0
        %v402 = vsel %vm397, %v389, 0
        %404 = vmatprep.subr.mxu0 0.0
        %405 = vmatpush1.msra.mxu0 %v393
        %406 = vmatprep.subr.mxu0 0.0
        %407 = vmatpush1.msra.mxu0 %v394
        %408 = vmatprep.subr.mxu0 0.0
        %409 = vmatpush1.msra.mxu0 %v395
        %410 = vmatprep.subr.mxu0 0.0
        %411 = vmatpush1.msra.mxu0 %v396
        %412 = vmatprep.subr.mxu0 0.0
        %413 = vmatpush1.msra.mxu0 0.0
        %414 = vmatprep.subr.mxu0 0.0
        %415 = vmatpush1.msra.mxu0 0.0
        %416 = vmatprep.subr.mxu0 0.0
        %417 = vmatpush1.msra.mxu0 0.0
        %418 = vmatprep.subr.mxu0 0.0
        %419 = vmatpush1.msra.mxu0 0.0
        %420 = vmatprep.subr.mxu0 0.0
        %421 = vmatpush1.msra.mxu0 0.0
        %422 = vmatprep.subr.mxu0 0.0
        %423 = vmatpush1.msra.mxu0 0.0
        %424 = vmatprep.subr.mxu0 0.0
        %425 = vmatpush1.msra.mxu0 0.0
        %426 = vmatprep.subr.mxu0 0.0
        %427 = vmatpush1.msra.mxu0 0.0
        %428 = vmatprep.subr.mxu0 0.0
        %429 = vmatpush1.msra.mxu0 0.0
        %430 = vmatprep.subr.mxu0 0.0
        %431 = vmatpush1.msra.mxu0 0.0
        %432 = vmatprep.subr.mxu0 0.0
        %433 = vmatpush1.msra.mxu0 0.0
        %434 = vmatprep.subr.mxu0 0.0
        %435 = vmatpush1.msra.mxu0 0.0
        %436 = vmatprep.subr.mxu0 0.0
        %437 = vmatpush1.msra.mxu0 0.0
        %438 = vmatprep.subr.mxu0 0.0
        %439 = vmatpush1.msra.mxu0 0.0
        %440 = vmatprep.subr.mxu0 0.0
        %441 = vmatpush1.msra.mxu0 0.0
        %442 = vmatprep.subr.mxu0 0.0
        %443 = vmatpush1.msra.mxu0 0.0
        %444 = vmatprep.subr.mxu0 0.0
        %445 = vmatpush1.msra.mxu0 0.0
        %446 = vmatprep.subr.mxu0 0.0
        %447 = vmatpush1.msra.mxu0 0.0
        %448 = vmatprep.subr.mxu0 0.0
        %449 = vmatpush1.msra.mxu0 0.0
        %450 = vmatprep.subr.mxu0 0.0
        %451 = vmatpush1.msra.mxu0 0.0
        %452 = vmatprep.subr.mxu0 0.0
        %453 = vmatpush1.msra.mxu0 0.0
        %454 = vmatprep.subr.mxu0 0.0
        %455 = vmatpush1.msra.mxu0 0.0
        %456 = vmatprep.subr.mxu0 0.0
        %457 = vmatpush1.msra.mxu0 0.0
        %458 = vmatprep.subr.mxu0 0.0
        %459 = vmatpush1.msra.mxu0 0.0
        %460 = vmatprep.subr.mxu0 0.0
        %461 = vmatpush1.msra.mxu0 0.0
        %462 = vmatprep.subr.mxu0 0.0
        %463 = vmatpush1.msra.mxu0 0.0
        %464 = vmatprep.subr.mxu0 0.0
        %465 = vmatpush1.msra.mxu0 0.0
        %466 = vmatprep.subr.mxu0 0.0
        %467 = vmatpush1.msra.mxu0 0.0
        %468 = vmatprep.mubr.f32.mxu0 0.0
        %469 = vmatmul.mubr.f32.gmra.mrb[0].mxu0 %v399
        %v470 = vpop.f32.mrb[0].mxu0
        %v471 = vadd.f32 0.0, %v470
        %v472 = vpop.f32.mrb[0].mxu0
        %473 = vmatprep.mubr.f32.mxu0 0.0
        %474 = vmatmul.mubr.f32.gmra.mrb[0].mxu0 %v402
        %v475 = vpop.f32.mrb[0].mxu0
        %v476 = vadd.f32 0.0, %v475
        %v477 = vpop.f32.mrb[0].mxu0
        %478 = vdwg.mxu0
        %v480 = vsel %vm397, %v296, 0
        %v483 = vsel %vm397, %v301, 0
        %485 = vmatprep.subr.mxu0 0.0
        %486 = vmatpush1.msra.mxu0 %v304
        %487 = vmatprep.subr.mxu0 0.0
        %488 = vmatpush1.msra.mxu0 %v305
        %489 = vmatprep.subr.mxu0 0.0
        %490 = vmatpush1.msra.mxu0 %v306
        %491 = vmatprep.subr.mxu0 0.0
        %492 = vmatpush1.msra.mxu0 %v307
        %493 = vmatprep.subr.mxu0 0.0
        %494 = vmatpush1.msra.mxu0 0.0
        %495 = vmatprep.subr.mxu0 0.0
        %496 = vmatpush1.msra.mxu0 0.0
        %497 = vmatprep.subr.mxu0 0.0
        %498 = vmatpush1.msra.mxu0 0.0
        %499 = vmatprep.subr.mxu0 0.0
        %500 = vmatpush1.msra.mxu0 0.0
        %501 = vmatprep.subr.mxu0 0.0
        %502 = vmatpush1.msra.mxu0 0.0
        %503 = vmatprep.subr.mxu0 0.0
        %504 = vmatpush1.msra.mxu0 0.0
        %505 = vmatprep.subr.mxu0 0.0
        %506 = vmatpush1.msra.mxu0 0.0
        %507 = vmatprep.subr.mxu0 0.0
        %508 = vmatpush1.msra.mxu0 0.0
        %509 = vmatprep.subr.mxu0 0.0
        %510 = vmatpush1.msra.mxu0 0.0
        %511 = vmatprep.subr.mxu0 0.0
        %512 = vmatpush1.msra.mxu0 0.0
        %513 = vmatprep.subr.mxu0 0.0
        %514 = vmatpush1.msra.mxu0 0.0
        %515 = vmatprep.subr.mxu0 0.0
        %516 = vmatpush1.msra.mxu0 0.0
        %517 = vmatprep.subr.mxu0 0.0
        %518 = vmatpush1.msra.mxu0 0.0
        %519 = vmatprep.subr.mxu0 0.0
        %520 = vmatpush1.msra.mxu0 0.0
        %521 = vmatprep.subr.mxu0 0.0
        %522 = vmatpush1.msra.mxu0 0.0
        %523 = vmatprep.subr.mxu0 0.0
        %524 = vmatpush1.msra.mxu0 0.0
        %525 = vmatprep.subr.mxu0 0.0
        %526 = vmatpush1.msra.mxu0 0.0
        %527 = vmatprep.subr.mxu0 0.0
        %528 = vmatpush1.msra.mxu0 0.0
        %529 = vmatprep.subr.mxu0 0.0
        %530 = vmatpush1.msra.mxu0 0.0
        %531 = vmatprep.subr.mxu0 0.0
        %532 = vmatpush1.msra.mxu0 0.0
        %533 = vmatprep.subr.mxu0 0.0
        %534 = vmatpush1.msra.mxu0 0.0
        %535 = vmatprep.subr.mxu0 0.0
        %536 = vmatpush1.msra.mxu0 0.0
        %537 = vmatprep.subr.mxu0 0.0
        %538 = vmatpush1.msra.mxu0 0.0
        %539 = vmatprep.subr.mxu0 0.0
        %540 = vmatpush1.msra.mxu0 0.0
        %541 = vmatprep.subr.mxu0 0.0
        %542 = vmatpush1.msra.mxu0 0.0
        %543 = vmatprep.subr.mxu0 0.0
        %544 = vmatpush1.msra.mxu0 0.0
        %545 = vmatprep.subr.mxu0 0.0
        %546 = vmatpush1.msra.mxu0 0.0
        %547 = vmatprep.subr.mxu0 0.0
        %548 = vmatpush1.msra.mxu0 0.0
        %549 = vmatprep.mubr.f32.mxu0 0.0
        %550 = vmatmul.mubr.f32.gmra.mrb[0].mxu0 %v480
        %v551 = vpop.f32.mrb[0].mxu0
        %v552 = vadd.f32 %v471, %v551
        %v553 = vpop.f32.mrb[0].mxu0
        %554 = vmatprep.mubr.f32.mxu0 0.0
        %555 = vmatmul.mubr.f32.gmra.mrb[0].mxu0 %v483
        %v556 = vpop.f32.mrb[0].mxu0
        %v557 = vadd.f32 %v476, %v556
        %v558 = vpop.f32.mrb[0].mxu0
        %559 = vdwg.mxu0
        %s560 = scalar_lea.vmem [#allocation5], 32
        %v561 = vld [vmem:[%s560] sm:$0xff]
        %v562 = vld [vmem:[%s560 + $0x8] sm:$0xff]
        %v564 = vsel %vm222, %v561, 0
        %v567 = vsel %vm222, %v562, 0
        %569 = vmatprep.subr.mxu0 0.0
        %570 = vmatpush1.msra.mxu0 %v218
        %571 = vmatprep.subr.mxu0 0.0
        %572 = vmatpush1.msra.mxu0 %v219
        %573 = vmatprep.subr.mxu0 0.0
        %574 = vmatpush1.msra.mxu0 0.0
        %575 = vmatprep.subr.mxu0 0.0
        %576 = vmatpush1.msra.mxu0 0.0
        %577 = vmatprep.subr.mxu0 0.0
        %578 = vmatpush1.msra.mxu0 0.0
        %579 = vmatprep.subr.mxu0 0.0
        %580 = vmatpush1.msra.mxu0 0.0
        %581 = vmatprep.subr.mxu0 0.0
        %582 = vmatpush1.msra.mxu0 0.0
        %583 = vmatprep.subr.mxu0 0.0
        %584 = vmatpush1.msra.mxu0 0.0
        %585 = vmatprep.subr.mxu0 0.0
        %586 = vmatpush1.msra.mxu0 0.0
        %587 = vmatprep.subr.mxu0 0.0
        %588 = vmatpush1.msra.mxu0 0.0
        %589 = vmatprep.subr.mxu0 0.0
        %590 = vmatpush1.msra.mxu0 0.0
        %591 = vmatprep.subr.mxu0 0.0
        %592 = vmatpush1.msra.mxu0 0.0
        %593 = vmatprep.subr.mxu0 0.0
        %594 = vmatpush1.msra.mxu0 0.0
        %595 = vmatprep.subr.mxu0 0.0
        %596 = vmatpush1.msra.mxu0 0.0
        %597 = vmatprep.subr.mxu0 0.0
        %598 = vmatpush1.msra.mxu0 0.0
        %599 = vmatprep.subr.mxu0 0.0
        %600 = vmatpush1.msra.mxu0 0.0
        %601 = vmatprep.subr.mxu0 0.0
        %602 = vmatpush1.msra.mxu0 0.0
        %603 = vmatprep.subr.mxu0 0.0
        %604 = vmatpush1.msra.mxu0 0.0
        %605 = vmatprep.subr.mxu0 0.0
        %606 = vmatpush1.msra.mxu0 0.0
        %607 = vmatprep.subr.mxu0 0.0
        %608 = vmatpush1.msra.mxu0 0.0
        %609 = vmatprep.subr.mxu0 0.0
        %610 = vmatpush1.msra.mxu0 0.0
        %611 = vmatprep.subr.mxu0 0.0
        %612 = vmatpush1.msra.mxu0 0.0
        %613 = vmatprep.subr.mxu0 0.0
        %614 = vmatpush1.msra.mxu0 0.0
        %615 = vmatprep.subr.mxu0 0.0
        %616 = vmatpush1.msra.mxu0 0.0
        %617 = vmatprep.subr.mxu0 0.0
        %618 = vmatpush1.msra.mxu0 0.0
        %619 = vmatprep.subr.mxu0 0.0
        %620 = vmatpush1.msra.mxu0 0.0
        %621 = vmatprep.subr.mxu0 0.0
        %622 = vmatpush1.msra.mxu0 0.0
        %623 = vmatprep.subr.mxu0 0.0
        %624 = vmatpush1.msra.mxu0 0.0
        %625 = vmatprep.subr.mxu0 0.0
        %626 = vmatpush1.msra.mxu0 0.0
        %627 = vmatprep.subr.mxu0 0.0
        %628 = vmatpush1.msra.mxu0 0.0
        %629 = vmatprep.subr.mxu0 0.0
        %630 = vmatpush1.msra.mxu0 0.0
        %631 = vmatprep.subr.mxu0 0.0
        %632 = vmatpush1.msra.mxu0 0.0
        %633 = vmatprep.mubr.f32.mxu0 0.0
        %634 = vmatmul.mubr.f32.gmra.mrb[0].mxu0 %v564
        %v635 = vpop.f32.mrb[0].mxu0
        %v636 = vadd.f32 0.0, %v635
        %v637 = vpop.f32.mrb[0].mxu0
        %638 = vmatprep.mubr.f32.mxu0 0.0
        %639 = vmatmul.mubr.f32.gmra.mrb[0].mxu0 %v567
        %v640 = vpop.f32.mrb[0].mxu0
        %v641 = vadd.f32 0.0, %v640
        %v642 = vpop.f32.mrb[0].mxu0
        %643 = vdwg.mxu0
        %s644 = scalar_lea.vmem [#allocation7], 64
        %v645 = vld [vmem:[%s644] sm:$0xff]
        %v646 = vld [vmem:[%s644 + $0x8] sm:$0xff]
        %v647 = vld [vmem:[%s644 + $0x10] sm:$0xff]
        %v648 = vld [vmem:[%s644 + $0x18] sm:$0xff]
        %v650 = vsel %vm397, %v636, 0
        %v653 = vsel %vm397, %v641, 0
        %655 = vmatprep.subr.mxu0 0.0
        %656 = vmatpush1.msra.mxu0 %v645
        %657 = vmatprep.subr.mxu0 0.0
        %658 = vmatpush1.msra.mxu0 %v646
        %659 = vmatprep.subr.mxu0 0.0
        %660 = vmatpush1.msra.mxu0 %v647
        %661 = vmatprep.subr.mxu0 0.0
        %662 = vmatpush1.msra.mxu0 %v648
        %663 = vmatprep.subr.mxu0 0.0
        %664 = vmatpush1.msra.mxu0 0.0
        %665 = vmatprep.subr.mxu0 0.0
        %666 = vmatpush1.msra.mxu0 0.0
        %667 = vmatprep.subr.mxu0 0.0
        %668 = vmatpush1.msra.mxu0 0.0
        %669 = vmatprep.subr.mxu0 0.0
        %670 = vmatpush1.msra.mxu0 0.0
        %671 = vmatprep.subr.mxu0 0.0
        %672 = vmatpush1.msra.mxu0 0.0
        %673 = vmatprep.subr.mxu0 0.0
        %674 = vmatpush1.msra.mxu0 0.0
        %675 = vmatprep.subr.mxu0 0.0
        %676 = vmatpush1.msra.mxu0 0.0
        %677 = vmatprep.subr.mxu0 0.0
        %678 = vmatpush1.msra.mxu0 0.0
        %679 = vmatprep.subr.mxu0 0.0
        %680 = vmatpush1.msra.mxu0 0.0
        %681 = vmatprep.subr.mxu0 0.0
        %682 = vmatpush1.msra.mxu0 0.0
        %683 = vmatprep.subr.mxu0 0.0
        %684 = vmatpush1.msra.mxu0 0.0
        %685 = vmatprep.subr.mxu0 0.0
        %686 = vmatpush1.msra.mxu0 0.0
        %687 = vmatprep.subr.mxu0 0.0
        %688 = vmatpush1.msra.mxu0 0.0
        %689 = vmatprep.subr.mxu0 0.0
        %690 = vmatpush1.msra.mxu0 0.0
        %691 = vmatprep.subr.mxu0 0.0
        %692 = vmatpush1.msra.mxu0 0.0
        %693 = vmatprep.subr.mxu0 0.0
        %694 = vmatpush1.msra.mxu0 0.0
        %695 = vmatprep.subr.mxu0 0.0
        %696 = vmatpush1.msra.mxu0 0.0
        %697 = vmatprep.subr.mxu0 0.0
        %698 = vmatpush1.msra.mxu0 0.0
        %699 = vmatprep.subr.mxu0 0.0
        %700 = vmatpush1.msra.mxu0 0.0
        %701 = vmatprep.subr.mxu0 0.0
        %702 = vmatpush1.msra.mxu0 0.0
        %703 = vmatprep.subr.mxu0 0.0
        %704 = vmatpush1.msra.mxu0 0.0
        %705 = vmatprep.subr.mxu0 0.0
        %706 = vmatpush1.msra.mxu0 0.0
        %707 = vmatprep.subr.mxu0 0.0
        %708 = vmatpush1.msra.mxu0 0.0
        %709 = vmatprep.subr.mxu0 0.0
        %710 = vmatpush1.msra.mxu0 0.0
        %711 = vmatprep.subr.mxu0 0.0
        %712 = vmatpush1.msra.mxu0 0.0
        %713 = vmatprep.subr.mxu0 0.0
        %714 = vmatpush1.msra.mxu0 0.0
        %715 = vmatprep.subr.mxu0 0.0
        %716 = vmatpush1.msra.mxu0 0.0
        %717 = vmatprep.subr.mxu0 0.0
        %718 = vmatpush1.msra.mxu0 0.0
        %719 = vmatprep.mubr.f32.mxu0 0.0
        %720 = vmatmul.mubr.f32.gmra.mrb[0].mxu0 %v650
        %v721 = vpop.f32.mrb[0].mxu0
        %v722 = vadd.f32 0.0, %v721
        %v723 = vpop.f32.mrb[0].mxu0
        %724 = vmatprep.mubr.f32.mxu0 0.0
        %725 = vmatmul.mubr.f32.gmra.mrb[0].mxu0 %v653
        %v726 = vpop.f32.mrb[0].mxu0
        %v727 = vadd.f32 0.0, %v726
        %v728 = vpop.f32.mrb[0].mxu0
        %729 = vdwg.mxu0
        %v730 = vadd.f32 %v552, %v722
        %v731 = vadd.f32 %v557, %v727
        %v732 = vmax.f32 %v730, 0.0
        %v733 = vmax.f32 %v731, 0.0
        %vm734 = vcmask 523264
        %735 = vst.msk [vmem:[%s217] sm:$0xff] %vm734, %v732
        %736 = vst.msk [vmem:[%s217 + $0x8] sm:$0xff] %vm734, %v733
        %s737 = sand.u32 %s97, 1
        %s738 = scalar_lea.sflag [#allocation4], %s737
        %s739 = sand.u32 %s97, 1
        %s740 = smul.addr %s739, 16
        %s741 = scalar_lea.vmem [#allocation8], %s740
        // Predicated region
        $region45: #{tpu_custom_call.1} parent=31 // pred_check
          %p742 = pneg %p107
        $region46: #{tpu_custom_call.1} parent=31 // pred_check_branch
          %744 = sbr.rel (%p742) target = $region48
        $region47: #{tpu_custom_call.1} parent=31 // pred_region
          %s746 = ssub.s32 256, 256
          %747 = vsyncadd %s738, %s746
          %s748 = smul.addr %s21, 2
          %s749 = smul.addr %s748, 128
          %s750 = scalar_lea.hbm %s3, %s749
          %s751 = sshll.u32 %s741, 4
          %s752 = int_to_ptr.vmem [resolvable:$true] %s751
          %757 = dma.vmem_to_hbm [thread:$0]  %s752, 256, %s750, %s738, 128, 128, 8
        $region48: #{tpu_custom_call.1} parent=31 // pred_fallthru
          _
      $region32: #{tpu_custom_call.1} parent=5 // pred_fallthru
        _
      %p758 = scmp.le.s32.totalorder 2, %s16
      // Predicated region
      $region49: #{tpu_custom_call.1} parent=5 // pred_check
        %p759 = pneg %p758
      $region50: #{tpu_custom_call.1} parent=5 // pred_check_branch
        %761 = sbr.rel (%p759) target = $region52
      $region51: #{tpu_custom_call.1} parent=5 // pred_region
        %s762 = ssub.s32 %s16, 2
        // Predicated region
        $region53: #{tpu_custom_call.1} parent=51 // pred_check
          %p763 = pneg %p113
        $region54: #{tpu_custom_call.1} parent=51 // pred_check_branch
          %765 = sbr.rel (%p763) target = $region56
        $region55: #{tpu_custom_call.1} parent=51 // pred_region
          %s766 = sand.u32 %s98, 1
          %s767 = scalar_lea.sflag [#allocation4], %s766
          %s768 = sand.u32 %s98, 1
          %s769 = smul.addr %s768, 16
          %s770 = scalar_lea.vmem [#allocation8], %s769
          %771 = dma.done %s767, 256
        $region56: #{tpu_custom_call.1} parent=51 // pred_fallthru
          _
      $region52: #{tpu_custom_call.1} parent=5 // pred_fallthru
        _
    $region6: #{tpu_custom_call.1} parent=1 // loop_footer
      %s20 = sadd.s32 1, %s16
    $region7: #{tpu_custom_call.1} parent=1 // loop_footer_branch
      %15 = sbr.rel target = $region3
    $region8: #{tpu_custom_call.1} parent=1 // loop_exit
      _
    %772 = vsyncpa [#allocation3], 1
    %s773 = scalar_lea.sflag [#allocation3], 1
    %774 = vsyncpa %s773, 1
    %775 = vsyncpa [#allocation6], 1
    %776 = vsyncpa [#allocation4], 1
    %s777 = scalar_lea.sflag [#allocation4], 1
    %778 = vsyncpa %s777, 1

</llo_original>
